<compile_context>
chip_gen: v6e
topology: v6e:2x2x1
jax: 0.10.0
libtpu: 0.0.40
codegen_flags: <defaults>
</compile_context>

<pallas_src>
import functools

import jax
import jax.numpy as jnp
import numpy as np
from jax.experimental import pallas as pl
from jax.experimental.pallas import tpu as pltpu


def _grad_loss_kernel(x_ref, m_ref, o_ref, *, plane_w: int, penalty: str):
    """x_ref: (B, Lp) planes (flattened H*W); m_ref: (2, Lp) 0/1 masks;
    o_ref: (1, 2, 8, 128) per-block partial sums [dH, dW]."""
    B, Lp = x_ref.shape
    x = x_ref[...].astype(jnp.float32)                       # (B, Lp)

    # Neighbour fetch via XLU rotation: roll(x, Lp-s)[i] == x[(i+s) % Lp].
    nxt_w = pltpu.roll(x, Lp - 1, axis=1)                    # x[h, w+1]
    nxt_h = pltpu.roll(x, (Lp - plane_w) % Lp, axis=1)       # x[h+1, w]

    dh = nxt_h - x
    dw = nxt_w - x
    if penalty == 'L2':
        dh = dh * dh
        dw = dw * dw
    else:
        dh = jnp.abs(dh)
        dw = jnp.abs(dw)

    # Zero out wrap-around / padding positions.
    dh = dh * m_ref[0:1, :]
    dw = dw * m_ref[1:2, :]

    def fold(t):                                             # (B, Lp) -> (8, 128)
        # Lane fold: add aligned 128-wide chunks (pure VALU, no relayout).
        r = t[:, 0:128]
        for c in range(128, Lp, 128):
            r = r + t[:, c:c + 128]
        # Sublane fold: add aligned 8-row groups.
        s = r[0:8, :]
        for b in range(8, B, 8):
            s = s + r[b:b + 8, :]
        return s

    o_ref[0, 0, :, :] = fold(dh)
    o_ref[0, 1, :, :] = fold(dw)


def gradient_loss_2d(x, penalty: str = 'L1', reduction: str = 'mean',
                     *, target_block_bytes: int = 4 * 1024 * 1024):
    """Pallas implementation of gradientLoss2d.forward for NCHW input `x`."""
    N, C, H, W = x.shape
    P = N * C
    L = H * W
    Lp = ((L + 127) // 128) * 128                     # lane-pad plane length
    itemsize = jnp.dtype(x.dtype).itemsize

    # Planes per grid step: multiple of 8, ~target_block_bytes per block.
    b_target = max(8, (target_block_bytes // max(1, Lp * itemsize)) // 8 * 8)
    p_ceil8 = ((P + 7) // 8) * 8
    B = min(b_target, p_ceil8)
    P_pad = ((P + B - 1) // B) * B
    G = P_pad // B

    xr = x.reshape(P, L)
    if P_pad != P or Lp != L:
        # Zero planes / zero columns contribute nothing (masked / zero diffs).
        xr = jnp.pad(xr, ((0, P_pad - P), (0, Lp - L)))

    # Validity masks over the flattened (H*W -> Lp) axis.
    col = np.arange(Lp)
    in_plane = col < L
    mask_h = ((col // W) < (H - 1)) & in_plane        # row h has a row h+1
    mask_w = ((col % W) < (W - 1)) & in_plane         # col w has a col w+1
    masks = jnp.asarray(np.stack([mask_h, mask_w]).astype(np.float32))  # (2, Lp)

    # VMEM budget: double-buffered input blocks + small extras; cap for v7x.
    block_bytes = B * Lp * itemsize
    vmem_limit = int(min(64 * 1024 * 1024,
                         max(32 * 1024 * 1024, 2 * block_bytes + (4 << 20))))

    partials = pl.pallas_call(
        functools.partial(_grad_loss_kernel, plane_w=W, penalty=penalty),
        out_shape=jax.ShapeDtypeStruct((G, 2, 8, 128), jnp.float32),
        grid=(G,),
        in_specs=[
            pl.BlockSpec((B, Lp), lambda g: (g, 0)),
            pl.BlockSpec((2, Lp), lambda g: (0, 0)),
        ],
        out_specs=pl.BlockSpec((1, 2, 8, 128), lambda g: (g, 0, 0, 0)),
        compiler_params=pltpu.CompilerParams(
            dimension_semantics=("parallel",),
            vmem_limit_bytes=vmem_limit,
        ),
    )(xr, masks)

    sums = jnp.sum(partials, axis=(0, 2, 3))          # (2,) -> [sum_dH, sum_dW]
    sum_dh, sum_dw = sums[0], sums[1]

    if reduction == 'mean':
        n_dh = N * C * (H - 1) * W
        n_dw = N * C * H * (W - 1)
        return (sum_dh / n_dh + sum_dw / n_dw) * 0.5
    return sum_dh + sum_dw


def _reference(x, penalty='L1', reduction='mean'):
    x = x.astype(jnp.float32)
    dH = jnp.abs(x[:, :, 1:, :] - x[:, :, :-1, :])
    dW = jnp.abs(x[:, :, :, 1:] - x[:, :, :, :-1])
    if penalty == 'L2':
        dH = dH * dH
        dW = dW * dW
    if reduction == 'mean':
        return (jnp.mean(dH) + jnp.mean(dW)) / 2.0
    return jnp.sum(dH) + jnp.sum(dW)


if __name__ == "__main__":
    key = jax.random.PRNGKey(0)
    x = jax.random.normal(key, (2, 4, 16, 16), dtype=jnp.float32)

    ok = True
    for penalty in ('L1', 'L2'):
        for reduction in ('mean', 'sum'):
            out = gradient_loss_2d(x, penalty=penalty, reduction=reduction)
            out = jax.block_until_ready(out)
            ref = _reference(x, penalty=penalty, reduction=reduction)
            if not np.allclose(np.asarray(out), np.asarray(ref),
                               rtol=1e-5, atol=1e-5):
                ok = False

    if ok:
        print("KERNEL_OK")
</pallas_src>

<mosaic_0001>
module attributes {stable_mosaic.version = 11 : i64} {
  func.func @_grad_loss_kernel(%arg0: i32, %arg1: memref<8x256xf32, #tpu.memory_space<vmem>>, %arg2: memref<2x256xf32, #tpu.memory_space<vmem>>, %arg3: memref<1x2x8x128xf32, #tpu.memory_space<vmem>>) attributes {dimension_semantics = [#tpu.dimension_semantics<parallel>], iteration_bounds = array<i64: 1>, scalar_prefetch = 0 : i64, scratch_operands = 0 : i64, tpu.core_type = #tpu.core_type<tc>, window_params = [{transform_indices = @transform_0, window_bounds = array<i64: 8, 256>}, {pipeline_mode = #tpu.pipeline_mode<synchronous>, transform_indices = @transform_1, window_bounds = array<i64: 2, 256>}, {transform_indices = @transform_2, window_bounds = array<i64: 1, 2, 8, 128>}]} {
    %c0 = arith.constant 0 : index
    %c0_0 = arith.constant 0 : index
    %0 = vector.load %arg1[%c0, %c0_0] : memref<8x256xf32, #tpu.memory_space<vmem>>, vector<8x256xf32>
    %c255_i32 = arith.constant 255 : i32
    %1 = tpu.dynamic_rotate %0 by %c255_i32 dim 1 : vector<8x256xf32>, i32 -> vector<8x256xf32>
    %c240_i32 = arith.constant 240 : i32
    %2 = tpu.dynamic_rotate %0 by %c240_i32 dim 1 : vector<8x256xf32>, i32 -> vector<8x256xf32>
    %3 = arith.subf %2, %0 : vector<8x256xf32>
    %4 = arith.subf %1, %0 : vector<8x256xf32>
    %5 = math.absf %3 : vector<8x256xf32>
    %6 = math.absf %4 : vector<8x256xf32>
    %c0_1 = arith.constant 0 : index
    %c0_2 = arith.constant 0 : index
    %7 = vector.load %arg2[%c0_1, %c0_2] : memref<2x256xf32, #tpu.memory_space<vmem>>, vector<1x256xf32>
    %8 = vector.broadcast %7 : vector<1x256xf32> to vector<8x256xf32>
    %9 = arith.mulf %5, %8 : vector<8x256xf32>
    %c1 = arith.constant 1 : index
    %c0_3 = arith.constant 0 : index
    %10 = vector.load %arg2[%c1, %c0_3] : memref<2x256xf32, #tpu.memory_space<vmem>>, vector<1x256xf32>
    %11 = vector.broadcast %10 : vector<1x256xf32> to vector<8x256xf32>
    %12 = arith.mulf %6, %11 : vector<8x256xf32>
    %13 = vector.extract_strided_slice %9 {offsets = [0, 0], sizes = [8, 128], strides = [1, 1]} : vector<8x256xf32> to vector<8x128xf32>
    %14 = vector.extract_strided_slice %9 {offsets = [0, 128], sizes = [8, 128], strides = [1, 1]} : vector<8x256xf32> to vector<8x128xf32>
    %15 = arith.addf %13, %14 : vector<8x128xf32>
    %c0_4 = arith.constant 0 : index
    %c0_5 = arith.constant 0 : index
    %c0_6 = arith.constant 0 : index
    %c0_7 = arith.constant 0 : index
    %16 = vector.load %arg3[%c0_4, %c0_5, %c0_6, %c0_7] : memref<1x2x8x128xf32, #tpu.memory_space<vmem>>, vector<1x1x8x128xf32>
    %17 = vector.shape_cast %16 : vector<1x1x8x128xf32> to vector<8x128xf32>
    %18 = vector.shape_cast %15 : vector<8x128xf32> to vector<1x1x8x128xf32>
    tpu.vector_store %arg3[%c0_4, %c0_5, %c0_6, %c0_7], %18 {strides = array<i32>} : memref<1x2x8x128xf32, #tpu.memory_space<vmem>>, vector<1x1x8x128xf32>,
    %19 = vector.extract_strided_slice %12 {offsets = [0, 0], sizes = [8, 128], strides = [1, 1]} : vector<8x256xf32> to vector<8x128xf32>
    %20 = vector.extract_strided_slice %12 {offsets = [0, 128], sizes = [8, 128], strides = [1, 1]} : vector<8x256xf32> to vector<8x128xf32>
    %21 = arith.addf %19, %20 : vector<8x128xf32>
    %c0_8 = arith.constant 0 : index
    %c1_9 = arith.constant 1 : index
    %c0_10 = arith.constant 0 : index
    %c0_11 = arith.constant 0 : index
    %22 = vector.load %arg3[%c0_8, %c1_9, %c0_10, %c0_11] : memref<1x2x8x128xf32, #tpu.memory_space<vmem>>, vector<1x1x8x128xf32>
    %23 = vector.shape_cast %22 : vector<1x1x8x128xf32> to vector<8x128xf32>
    %24 = vector.shape_cast %21 : vector<8x128xf32> to vector<1x1x8x128xf32>
    tpu.vector_store %arg3[%c0_8, %c1_9, %c0_10, %c0_11], %24 {strides = array<i32>} : memref<1x2x8x128xf32, #tpu.memory_space<vmem>>, vector<1x1x8x128xf32>,
    return
  }
  func.func @transform_0(%arg0: i32) -> (i32, i32) {
    %c0_i32 = arith.constant 0 : i32
    %c0_i32_0 = arith.constant 0 : i32
    return %arg0, %c0_i32 : i32, i32
  }
  func.func @transform_1(%arg0: i32) -> (i32, i32) {
    %c0_i32 = arith.constant 0 : i32
    %c0_i32_0 = arith.constant 0 : i32
    %c0_i32_1 = arith.constant 0 : i32
    return %c0_i32, %c0_i32_0 : i32, i32
  }
  func.func @transform_2(%arg0: i32) -> (i32, i32, i32, i32) {
    %c0_i32 = arith.constant 0 : i32
    %c0_i32_0 = arith.constant 0 : i32
    %c0_i32_1 = arith.constant 0 : i32
    %c0_i32_2 = arith.constant 0 : i32
    return %arg0, %c0_i32, %c0_i32_0, %c0_i32_1 : i32, i32, i32, i32
  }
}

</mosaic_0001>

<llo_original>
// kernel: tpu_custom_call.1
$region0: #{tpu_custom_call.1}
  #allocation0 [shape = 'u32[]', space=smem, size = 0x4, offset = 0x4, fixed_abs, tag = 'smem constant byte address 0x4 - core index']
  #allocation1 [shape = 'u32[144,128]{1,0:T(1,128)}', space=vmem, size = 0x12000, scoped, tag = 'internal scratch']
  %s0 = inlined_call_operand.hbm [shape: f32[8,256], index: 0, kind: input, shape index: {}]
  %s1 = inlined_call_operand.hbm [shape: f32[2,256], index: 1, kind: input, shape index: {}]
  %s2 = inlined_call_operand.hbm [shape: f32[1,2,8,128], index: 2, kind: output, shape index: {}]
  %s3 = sld [smem:[#allocation0]]
  $region26: #{tpu_custom_call.1} parent=0
    _
  %s5 = ssub.s32 1, %s3
  %s6 = scalar_select 0, %s5, %s3
  $region1: #{tpu_custom_call.1} parent=0
    #allocation2 [shape = 'u8[8192]{0}', space=vmem, size = 0x2000, scoped, tag = 'input window, operand 0, single buffered']
    #allocation3 [shape = 's32[1]{0}', space=sflag, size = 0x4, scoped, tag = 'scoped memory for tpu_custom_call.1']
    #allocation4 [shape = 's32[1]{0}', space=sflag, size = 0x4, scoped, tag = 'scoped memory for tpu_custom_call.1']
    #allocation5 [shape = 'u8[2048]{0}', space=vmem, size = 0x800, scoped, tag = 'input window, operand 1, single buffered']
    #allocation6 [shape = 's32[1]{0}', space=sflag, size = 0x4, scoped, tag = 'scoped memory for tpu_custom_call.1']
    #allocation7 [shape = 'u8[8192]{0}', space=vmem, size = 0x2000, scoped, tag = 'output window, operand 0, single buffered']
    %7 = vsyncpa [#allocation3], 0
    %8 = vsyncpa [#allocation6], 0
    %9 = vsyncpa [#allocation4], 0
    // Predicated region
    $region2: #{tpu_custom_call.1} parent=1 // pred_check
      _
    $region3: #{tpu_custom_call.1} parent=1 // pred_check_branch
      %11 = sbr.rel (0) target = $region5
    $region4: #{tpu_custom_call.1} parent=1 // pred_region
      %s13 = ssub.s32 256, 256
      %14 = vsyncadd [#allocation3], %s13
      %s16 = sshll.u32 [#allocation2], 4
      %s17 = int_to_ptr.vmem [resolvable:$true] %s16
      %19 = dma.hbm_to_vmem [thread:$0]  %s0, 256, %s17, [#allocation3]
    $region5: #{tpu_custom_call.1} parent=1 // pred_fallthru
      _
    // Predicated region
    $region6: #{tpu_custom_call.1} parent=1 // pred_check
      _
    $region7: #{tpu_custom_call.1} parent=1 // pred_check_branch
      %21 = sbr.rel (0) target = $region9
    $region8: #{tpu_custom_call.1} parent=1 // pred_region
      %s23 = ssub.s32 64, 64
      %24 = vsyncadd [#allocation6], %s23
      %s26 = sshll.u32 [#allocation5], 4
      %s27 = int_to_ptr.vmem [resolvable:$true] %s26
      %29 = dma.hbm_to_vmem [thread:$0]  %s1, 64, %s27, [#allocation6]
    $region9: #{tpu_custom_call.1} parent=1 // pred_fallthru
      _
    // Predicated region
    $region10: #{tpu_custom_call.1} parent=1 // pred_check
      _
    $region11: #{tpu_custom_call.1} parent=1 // pred_check_branch
      %31 = sbr.rel (0) target = $region13
    $region12: #{tpu_custom_call.1} parent=1 // pred_region
      %32 = dma.done [#allocation3], 256
    $region13: #{tpu_custom_call.1} parent=1 // pred_fallthru
      _
    // Predicated region
    $region14: #{tpu_custom_call.1} parent=1 // pred_check
      _
    $region15: #{tpu_custom_call.1} parent=1 // pred_check_branch
      %34 = sbr.rel (0) target = $region17
    $region16: #{tpu_custom_call.1} parent=1 // pred_region
      %35 = dma.done [#allocation6], 64
    $region17: #{tpu_custom_call.1} parent=1 // pred_fallthru
      _
    %v36 = vld [vmem:[#allocation2] sm:$0xff]
    %v37 = vld [vmem:[#allocation2 + $0x8] sm:$0xff]
    %38 = vrot.lane.b32.xlu0 %v36, 127
    %v39 = vpop.permute.xlu0 %38
    %40 = vrot.lane.b32.xlu0 %v37, 127
    %v41 = vpop.permute.xlu0 %40
    %v42 = vlaneseq
    %v43 = vand.u32 %v42, 127
    %vm44 = vcmp.lt.s32.totalorder %v43, 127
    %v45 = vsel %vm44, %v39, %v41
    %v46 = vsel %vm44, %v41, %v39
    %47 = vrot.lane.b32.xlu0 %v36, 112
    %v48 = vpop.permute.xlu0 %47
    %49 = vrot.lane.b32.xlu0 %v37, 112
    %v50 = vpop.permute.xlu0 %49
    %vm51 = vcmp.lt.s32.totalorder %v43, 112
    %v52 = vsel %vm51, %v48, %v50
    %v53 = vsel %vm51, %v50, %v48
    %v54 = vsub.f32 %v52, %v36
    %v55 = vsub.f32 %v53, %v37
    %v56 = vsub.f32 %v45, %v36
    %v57 = vsub.f32 %v46, %v37
    %v58 = vand.u32 2147483647, %v54
    %v59 = vand.u32 2147483647, %v55
    %v60 = vand.u32 2147483647, %v56
    %v61 = vand.u32 2147483647, %v57
    %v62 = vld [vmem:[#allocation5] ss:$2 sm:$0x3]
    %v64 = vlaneseq
    %v65 = vshrl.u32 %v64, 7
    %v66 = vsub.s32 0, %v65
    %v67 = vrot.slane %v62, %v66
    %v68 = vlaneseq
    %v69 = vshrl.u32 %v68, 7
    %v70 = vsub.s32 1, %v69
    %v71 = vrot.slane %v62, %v70
    %v74 = vmul.f32 %v58, %v67
    %v75 = vmul.f32 %v59, %v71
    %s76 = scalar_lea.vmem [#allocation5], 1
    %v77 = vld [vmem:[%s76] ss:$2 sm:$0x3]
    %v79 = vlaneseq
    %v80 = vshrl.u32 %v79, 7
    %v81 = vsub.s32 0, %v80
    %v82 = vrot.slane %v77, %v81
    %v83 = vlaneseq
    %v84 = vshrl.u32 %v83, 7
    %v85 = vsub.s32 1, %v84
    %v86 = vrot.slane %v77, %v85
    %v89 = vmul.f32 %v60, %v82
    %v90 = vmul.f32 %v61, %v86
    %v91 = vadd.f32 %v74, %v75
    %92 = vst [vmem:[#allocation7] sm:$0xff] %v91
    %v93 = vadd.f32 %v89, %v90
    %s94 = scalar_lea.vmem [#allocation7], 8
    %95 = vst [vmem:[%s94] sm:$0xff] %v93
    // Predicated region
    $region18: #{tpu_custom_call.1} parent=1 // pred_check
      _
    $region19: #{tpu_custom_call.1} parent=1 // pred_check_branch
      %97 = sbr.rel (0) target = $region21
    $region20: #{tpu_custom_call.1} parent=1 // pred_region
      %s99 = ssub.s32 256, 256
      %100 = vsyncadd [#allocation4], %s99
      %s101 = sshll.u32 [#allocation7], 4
      %s102 = int_to_ptr.vmem [resolvable:$true] %s101
      %107 = dma.vmem_to_hbm [thread:$0]  %s102, 256, %s2, [#allocation4], 128, 128, 8
    $region21: #{tpu_custom_call.1} parent=1 // pred_fallthru
      _
    // Predicated region
    $region22: #{tpu_custom_call.1} parent=1 // pred_check
      _
    $region23: #{tpu_custom_call.1} parent=1 // pred_check_branch
      %109 = sbr.rel (0) target = $region25
    $region24: #{tpu_custom_call.1} parent=1 // pred_region
      %110 = dma.done [#allocation4], 256
    $region25: #{tpu_custom_call.1} parent=1 // pred_fallthru
      _
    %111 = vsyncpa [#allocation3], 1
    %112 = vsyncpa [#allocation6], 1
    %113 = vsyncpa [#allocation4], 1

</llo_original>
